<compile_context>
chip_gen: v7x
topology: tpu7x:2x2x1
jax: 0.10.0
libtpu: 0.0.40
codegen_flags: <defaults>
</compile_context>

<pallas_src>
import numpy as np

import jax
import jax.numpy as jnp
from jax.experimental import pallas as pl
from jax.experimental.pallas import tpu as pltpu


def _round_up(x, m):
    return ((x + m - 1) // m) * m


def _sigurdsson_text_kernel(block_lang_ref,  # SMEM (nb,) int32 scalar prefetch (used by index_maps)
                            emb_ref,         # (Bb, L, Hs) bf16   embedded text block (single language)
                            wf_ref,          # (Hs, H)     bf16   fused adapt@linear1 weight for this block's language
                            bf_ref,          # (1, H)      f32    fused adapt/linear1 bias for this block's language
                            w2_ref,          # (H, C)      bf16   TextEncoder.linear2 weight (grid-invariant)
                            b2_ref,          # (1, C)      f32    TextEncoder.linear2 bias (grid-invariant)
                            out_ref):        # (Bb, C)     f32    normalized txt_to_img_emb block
    del block_lang_ref  # only consumed by the BlockSpec index_maps
    Bb, L, Hs = emb_ref.shape

    # Fused AdaptLayer + linear1 as ONE large 2D MXU matmul (M = Bb*L), bf16 in / f32 acc.
    x = emb_ref[...].reshape(Bb * L, Hs)
    h1 = jnp.dot(x, wf_ref[...], preferred_element_type=jnp.float32)          # (Bb*L, H) f32
    h1 = jnp.maximum(h1 + bf_ref[...], 0.0)                                   # bias + ReLU in f32

    # pool=True: max over the sequence dimension.
    pooled = jnp.max(h1.reshape(Bb, L, -1), axis=1)                           # (Bb, H) f32

    # TextEncoder.linear2 (bf16 operands, f32 accumulation).
    out = jnp.dot(pooled.astype(w2_ref.dtype), w2_ref[...],
                  preferred_element_type=jnp.float32) + b2_ref[...]           # (Bb, C) f32

    # x / sqrt(sum(x**2, -1, keepdim=True)) via EUP rsqrt (+eps to avoid inf on degenerate rows).
    sumsq = jnp.sum(out * out, axis=-1, keepdims=True)
    out_ref[...] = out * jax.lax.rsqrt(sumsq + 1e-12)


def sigurdsson_text_forward(text_input_ids, language, params, block_b=16):
    """Returns txt_to_img_emb of shape (B, contrastive_size).

    Not jittable end-to-end: the language grouping (padding each language's samples to a
    multiple of block_b) is done eagerly on host. The heavy compute runs in one pallas_call.
    """
    B, L = text_input_ids.shape
    num_lang, _, Hs = params["embeddings"].shape
    H = params["w1"].shape[1]
    C = params["w2"].shape[1]
    Hs_pad = _round_up(Hs, 128)
    H_pad = _round_up(H, 128)

    # ---- one-time parameter transform: lane-pad Hs/H, fold AdaptLayer into linear1, cast ----
    emb_tab = jnp.pad(params["embeddings"], ((0, 0), (0, 0), (0, Hs_pad - Hs)))
    adapt_w = jnp.pad(params["adapt_w"], ((0, 0), (0, Hs_pad - Hs), (0, Hs_pad - Hs)))
    adapt_b = jnp.pad(params["adapt_b"], ((0, 0), (0, 0), (0, Hs_pad - Hs)))
    w1 = jnp.pad(params["w1"], ((0, Hs_pad - Hs), (0, H_pad - H)))
    b1 = jnp.pad(params["b1"], ((0, 0), (0, H_pad - H)))
    w2 = jnp.pad(params["w2"], ((0, H_pad - H), (0, 0)))
    b2 = params["b2"]

    # relu((x @ Aw + Ab) @ W1 + b1) == relu(x @ (Aw @ W1) + (Ab @ W1 + b1))
    wf = jnp.einsum("lij,jk->lik", adapt_w, w1)               # (num_lang, Hs_pad, H_pad) f32
    bf = jnp.einsum("lxj,jk->lxk", adapt_b, w1) + b1          # (num_lang, 1, H_pad)      f32

    emb_tab_b16 = emb_tab.astype(jnp.bfloat16)
    wf_b16 = wf.astype(jnp.bfloat16)
    w2_b16 = w2.astype(jnp.bfloat16)
    bf_f32 = bf.astype(jnp.float32)
    b2_f32 = b2.astype(jnp.float32)

    # ---- group the batch by language so every block is single-language ----
    lang_np = np.asarray(jax.device_get(language)).astype(np.int64)
    perm_chunks = []
    block_langs = []
    for l in np.unique(lang_np):
        idx = np.nonzero(lang_np == l)[0]
        n_pad = _round_up(len(idx), block_b)
        perm_chunks.append(np.concatenate([idx, np.full(n_pad - len(idx), -1, np.int64)]))
        block_langs.extend([int(l)] * (n_pad // block_b))
    perm = np.concatenate(perm_chunks)                        # (B_total,) original index or -1 (dummy)
    block_lang = jnp.asarray(np.asarray(block_langs, np.int32))   # (nb,) per-block language id
    B_total = int(perm.shape[0])
    nb = B_total // block_b

    # Per-language embedding lookup on the grouped/padded batch (dummies -> padding id 0 -> zeros).
    valid = jnp.asarray(perm >= 0)
    safe_perm = jnp.asarray(np.where(perm >= 0, perm, 0))
    ids_sorted = jnp.where(valid[:, None], text_input_ids[safe_perm], 0)       # (B_total, L)
    lang_rows = jnp.repeat(block_lang, block_b)                                # (B_total,)
    emb = emb_tab_b16[lang_rows[:, None], ids_sorted]                          # (B_total, L, Hs_pad) bf16

    flops = 2 * B_total * L * Hs_pad * H_pad + 2 * B_total * H_pad * C
    bytes_accessed = (2 * emb.size + 2 * wf_b16.size + 4 * bf_f32.size
                      + 2 * w2_b16.size + 4 * b2_f32.size + 4 * B_total * C)
    cost = pl.CostEstimate(flops=flops, transcendentals=B_total,
                           bytes_accessed=bytes_accessed)

    grid_spec = pltpu.PrefetchScalarGridSpec(
        num_scalar_prefetch=1,          # block_lang lands in SMEM, fed to every index_map
        grid=(nb,),
        in_specs=[
            pl.BlockSpec((block_b, L, Hs_pad), lambda i, bl: (i, 0, 0)),       # embedded text block
            pl.BlockSpec((None, Hs_pad, H_pad), lambda i, bl: (bl[i], 0, 0)),  # per-language fused W
            pl.BlockSpec((None, 1, H_pad), lambda i, bl: (bl[i], 0, 0)),       # per-language fused bias
            pl.BlockSpec((H_pad, C), lambda i, bl: (0, 0)),                    # linear2 W (resident)
            pl.BlockSpec((1, C), lambda i, bl: (0, 0)),                        # linear2 b (resident)
        ],
        out_specs=pl.BlockSpec((block_b, C), lambda i, bl: (i, 0)),
    )

    out = pl.pallas_call(
        _sigurdsson_text_kernel,
        out_shape=jax.ShapeDtypeStruct((B_total, C), jnp.float32),
        grid_spec=grid_spec,
        compiler_params=pltpu.CompilerParams(dimension_semantics=("parallel",)),
        cost_estimate=cost,
    )(block_lang, emb, wf_b16, bf_f32, w2_b16, b2_f32)

    # Scatter the grouped results back to the original batch order, dropping dummies.
    pos = np.zeros(B, dtype=np.int64)
    valid_pos = np.nonzero(perm >= 0)[0]
    pos[perm[valid_pos]] = valid_pos
    return out[jnp.asarray(pos)]


def _reference_forward(text_input_ids, language, params):
    """Pure-JAX f32 reference mirroring the PyTorch forward (text path), un-fused."""
    emb = params["embeddings"][language[:, None], text_input_ids].astype(jnp.float32)  # (B, L, Hs)
    aw = params["adapt_w"][language]          # (B, Hs, Hs)
    ab = params["adapt_b"][language]          # (B, 1, Hs)
    h = jnp.einsum("bld,bdh->blh", emb, aw) + ab
    h1 = jnp.maximum(h @ params["w1"] + params["b1"], 0.0)   # (B, L, H)
    pooled = jnp.max(h1, axis=1)                              # (B, H)
    out = pooled @ params["w2"] + params["b2"]                # (B, C)
    return out / jnp.sqrt(jnp.sum(out * out, axis=-1, keepdims=True))


def init_params(key, num_lang, vocab_size, sig_hid, hidden, contrastive):
    ks = jax.random.split(key, 8)
    embeddings = 0.02 * jax.random.normal(ks[0], (num_lang, vocab_size, sig_hid), jnp.float32)
    embeddings = embeddings.at[:, 0, :].set(0.0)   # padding_idx=0
    # weights stored as (in, out) = W.T relative to nn.Linear
    adapt_w = 0.1 * jax.random.normal(ks[1], (num_lang, sig_hid, sig_hid), jnp.float32)
    adapt_b = 0.1 * jax.random.normal(ks[2], (num_lang, 1, sig_hid), jnp.float32)
    w1 = 0.1 * jax.random.normal(ks[3], (sig_hid, hidden), jnp.float32)
    b1 = 0.1 * jax.random.normal(ks[4], (1, hidden), jnp.float32)
    w2 = 0.1 * jax.random.normal(ks[5], (hidden, contrastive), jnp.float32)
    b2 = 0.1 * jax.random.normal(ks[6], (1, contrastive), jnp.float32)
    return dict(embeddings=embeddings, adapt_w=adapt_w, adapt_b=adapt_b,
                w1=w1, b1=b1, w2=w2, b2=b2)


if __name__ == "__main__":
    # small shapes consistent with the module's forward
    B, L = 4, 8                 # batch, sequence length
    NUM_LANG = 2
    VOCAB = 50
    SIG_HID = 32                # cfg.sigurdsson_hid_size
    HIDDEN = 64                 # cfg.hidden_size
    CONTRASTIVE = 128           # cfg.contrastive_size

    key = jax.random.PRNGKey(0)
    k_ids, k_lang, k_params = jax.random.split(key, 3)

    text_input_ids = jax.random.randint(k_ids, (B, L), 0, VOCAB, dtype=jnp.int32)
    language = jax.random.randint(k_lang, (B,), 0, NUM_LANG, dtype=jnp.int32)
    params = init_params(k_params, NUM_LANG, VOCAB, SIG_HID, HIDDEN, CONTRASTIVE)

    # block_b=16 -> M = Bb*L = 128 per matmul; output slab (16, 128) is lane/sublane dense.
    txt_to_img_emb = sigurdsson_text_forward(text_input_ids, language, params, block_b=16)
    txt_to_img_emb = jax.block_until_ready(txt_to_img_emb)

    ref = _reference_forward(text_input_ids, language, params)
    assert txt_to_img_emb.shape == (B, CONTRASTIVE)
    # bf16 matmul operands (f32 accumulation) -> compare against the f32 reference with a
    # correspondingly relaxed tolerance.
    assert jnp.allclose(txt_to_img_emb, ref, atol=1e-2, rtol=1e-2), "mismatch vs reference"

    # outputs tuple mirroring the PyTorch forward (img_input=None):
    outputs = (None, None, txt_to_img_emb, None, None)

    print("KERNEL_OK")
</pallas_src>

<mosaic_0001>
module attributes {stable_mosaic.version = 11 : i64} {
  func.func @_sigurdsson_text_kernel(%arg0: i32, %arg1: memref<2xi32, #tpu.memory_space<smem>>, %arg2: memref<16x8x128xbf16, #tpu.memory_space<vmem>>, %arg3: memref<1x128x128xbf16, #tpu.memory_space<vmem>>, %arg4: memref<1x1x128xf32, #tpu.memory_space<vmem>>, %arg5: memref<128x128xbf16, #tpu.memory_space<vmem>>, %arg6: memref<1x128xf32, #tpu.memory_space<vmem>>, %arg7: memref<16x128xf32, #tpu.memory_space<vmem>>) attributes {dimension_semantics = [#tpu.dimension_semantics<parallel>], iteration_bounds = array<i64: 2>, scalar_prefetch = 1 : i64, scratch_operands = 0 : i64, tpu.core_type = #tpu.core_type<tc>, window_params = [{transform_indices = @transform_0, window_bounds = array<i64: 16, 8, 128>}, {transform_indices = @transform_1, window_bounds = array<i64: 1, 128, 128>}, {transform_indices = @transform_2, window_bounds = array<i64: 1, 1, 128>}, {pipeline_mode = #tpu.pipeline_mode<synchronous>, transform_indices = @transform_3, window_bounds = array<i64: 128, 128>}, {pipeline_mode = #tpu.pipeline_mode<synchronous>, transform_indices = @transform_4, window_bounds = array<i64: 1, 128>}, {transform_indices = @transform_5, window_bounds = array<i64: 16, 128>}]} {
    %c0 = arith.constant 0 : index
    %c0_0 = arith.constant 0 : index
    %c0_1 = arith.constant 0 : index
    %0 = vector.load %arg2[%c0, %c0_0, %c0_1] : memref<16x8x128xbf16, #tpu.memory_space<vmem>>, vector<16x8x128xbf16>
    %1 = vector.shape_cast %0 : vector<16x8x128xbf16> to vector<128x128xbf16>
    %c0_2 = arith.constant 0 : index
    %c0_3 = arith.constant 0 : index
    %c0_4 = arith.constant 0 : index
    %2 = vector.load %arg3[%c0_2, %c0_3, %c0_4] : memref<1x128x128xbf16, #tpu.memory_space<vmem>>, vector<1x128x128xbf16>
    %3 = vector.shape_cast %2 : vector<1x128x128xbf16> to vector<128x128xbf16>
    %cst = arith.constant dense<0.000000e+00> : vector<128x128xf32>
    %4 = tpu.matmul %1, %3, %cst {dimension_numbers = #tpu.dot_dimension_numbers<[1], [0], [0], [1], [0, 0, 1, 1], [], []>} : vector<128x128xbf16>, vector<128x128xbf16>, vector<128x128xf32> -> vector<128x128xf32>
    %c0_5 = arith.constant 0 : index
    %c0_6 = arith.constant 0 : index
    %c0_7 = arith.constant 0 : index
    %5 = vector.load %arg4[%c0_5, %c0_6, %c0_7] : memref<1x1x128xf32, #tpu.memory_space<vmem>>, vector<1x1x128xf32>
    %6 = vector.shape_cast %5 : vector<1x1x128xf32> to vector<1x128xf32>
    %7 = vector.broadcast %6 : vector<1x128xf32> to vector<128x128xf32>
    %8 = arith.addf %4, %7 : vector<128x128xf32>
    %cst_8 = arith.constant 0.000000e+00 : f32
    %9 = vector.broadcast %cst_8 : f32 to vector<128x128xf32>
    %10 = arith.maximumf %8, %9 : vector<128x128xf32>
    %11 = vector.shape_cast %10 : vector<128x128xf32> to vector<16x8x128xf32>
    %cst_9 = arith.constant dense<0xFF800000> : vector<16x128xf32>
    %12 = vector.multi_reduction <maximumf>, %11, %cst_9 [1] : vector<16x8x128xf32> to vector<16x128xf32>
    %13 = arith.truncf %12 : vector<16x128xf32> to vector<16x128xbf16>
    %c0_10 = arith.constant 0 : index
    %c0_11 = arith.constant 0 : index
    %14 = vector.load %arg5[%c0_10, %c0_11] : memref<128x128xbf16, #tpu.memory_space<vmem>>, vector<128x128xbf16>
    %cst_12 = arith.constant dense<0.000000e+00> : vector<16x128xf32>
    %15 = tpu.matmul %13, %14, %cst_12 {dimension_numbers = #tpu.dot_dimension_numbers<[1], [0], [0], [1], [0, 0, 1, 1], [], []>} : vector<16x128xbf16>, vector<128x128xbf16>, vector<16x128xf32> -> vector<16x128xf32>
    %c0_13 = arith.constant 0 : index
    %c0_14 = arith.constant 0 : index
    %16 = vector.load %arg6[%c0_13, %c0_14] : memref<1x128xf32, #tpu.memory_space<vmem>>, vector<1x128xf32>
    %17 = vector.broadcast %16 : vector<1x128xf32> to vector<16x128xf32>
    %18 = arith.addf %15, %17 : vector<16x128xf32>
    %19 = arith.mulf %18, %18 : vector<16x128xf32>
    %cst_15 = arith.constant dense<0.000000e+00> : vector<16xf32>
    %20 = vector.multi_reduction <add>, %19, %cst_15 [1] : vector<16x128xf32> to vector<16xf32>
    %21 = vector.shape_cast %20 : vector<16xf32> to vector<16x1xf32>
    %cst_16 = arith.constant 9.99999996E-13 : f32
    %22 = vector.broadcast %cst_16 : f32 to vector<16x1xf32>
    %23 = arith.addf %21, %22 : vector<16x1xf32>
    %24 = math.rsqrt %23 : vector<16x1xf32>
    %25 = vector.broadcast %24 : vector<16x1xf32> to vector<16x128xf32>
    %26 = arith.mulf %18, %25 : vector<16x128xf32>
    %c0_17 = arith.constant 0 : index
    %c0_18 = arith.constant 0 : index
    %27 = vector.load %arg7[%c0_17, %c0_18] : memref<16x128xf32, #tpu.memory_space<vmem>>, vector<16x128xf32>
    tpu.vector_store %arg7[%c0_17, %c0_18], %26 {strides = array<i32>} : memref<16x128xf32, #tpu.memory_space<vmem>>, vector<16x128xf32>,
    return
  }
  func.func @transform_0(%arg0: i32, %arg1: memref<2xi32, #tpu.memory_space<smem>>) -> (i32, i32, i32) {
    %c0_i32 = arith.constant 0 : i32
    %c0_i32_0 = arith.constant 0 : i32
    %c0_i32_1 = arith.constant 0 : i32
    return %arg0, %c0_i32, %c0_i32_0 : i32, i32, i32
  }
  func.func @transform_1(%arg0: i32, %arg1: memref<2xi32, #tpu.memory_space<smem>>) -> (i32, i32, i32) {
    %0 = arith.index_cast %arg0 : i32 to index
    %1 = memref.load %arg1[%0] : memref<2xi32, #tpu.memory_space<smem>>
    %c0_i32 = arith.constant 0 : i32
    %c0_i32_0 = arith.constant 0 : i32
    %c0_i32_1 = arith.constant 0 : i32
    return %1, %c0_i32, %c0_i32_0 : i32, i32, i32
  }
  func.func @transform_2(%arg0: i32, %arg1: memref<2xi32, #tpu.memory_space<smem>>) -> (i32, i32, i32) {
    %0 = arith.index_cast %arg0 : i32 to index
    %1 = memref.load %arg1[%0] : memref<2xi32, #tpu.memory_space<smem>>
    %c0_i32 = arith.constant 0 : i32
    %c0_i32_0 = arith.constant 0 : i32
    %c0_i32_1 = arith.constant 0 : i32
    return %1, %c0_i32, %c0_i32_0 : i32, i32, i32
  }
  func.func @transform_3(%arg0: i32, %arg1: memref<2xi32, #tpu.memory_space<smem>>) -> (i32, i32) {
    %c0_i32 = arith.constant 0 : i32
    %c0_i32_0 = arith.constant 0 : i32
    %c0_i32_1 = arith.constant 0 : i32
    return %c0_i32, %c0_i32_0 : i32, i32
  }
  func.func @transform_4(%arg0: i32, %arg1: memref<2xi32, #tpu.memory_space<smem>>) -> (i32, i32) {
    %c0_i32 = arith.constant 0 : i32
    %c0_i32_0 = arith.constant 0 : i32
    %c0_i32_1 = arith.constant 0 : i32
    return %c0_i32, %c0_i32_0 : i32, i32
  }
  func.func @transform_5(%arg0: i32, %arg1: memref<2xi32, #tpu.memory_space<smem>>) -> (i32, i32) {
    %c0_i32 = arith.constant 0 : i32
    %c0_i32_0 = arith.constant 0 : i32
    return %arg0, %c0_i32 : i32, i32
  }
}

</mosaic_0001>

<llo_original>
// kernel: tpu_custom_call.1
$region0: #{tpu_custom_call.1}
  #allocation0 [shape = 'u32[]', space=smem, size = 0x4, offset = 0x4, fixed_abs, tag = 'smem constant byte address 0x4 - core index']
  #allocation1 [shape = 'u32[144,128]{1,0:T(1,128)}', space=vmem, size = 0x12000, scoped, tag = 'internal scratch']
  #allocation2 [shape = 's32[1]{0}', space=sflag, size = 0x4, scoped, tag = 'scoped memory for tpu_custom_call.1']
  #allocation3 [shape = 'u8[512]{0}', space=smem, size = 0x200, scoped, tag = 'prefetched SMEM operand 0']
  %s0 = inlined_call_operand.hbm [shape: s32[2], index: 0, kind: input, shape index: {}]
  %s1 = inlined_call_operand.hbm [shape: bf16[32,8,128], index: 1, kind: input, shape index: {}]
  %s2 = inlined_call_operand.hbm [shape: bf16[2,128,128], index: 2, kind: input, shape index: {}]
  %s3 = inlined_call_operand.vmem [shape: f32[2,1,128], index: 3, kind: input, shape index: {}]
  %s4 = inlined_call_operand.hbm [shape: bf16[128,128], index: 4, kind: input, shape index: {}]
  %s5 = inlined_call_operand.vmem [shape: f32[1,128], index: 5, kind: input, shape index: {}]
  %s6 = inlined_call_operand.hbm [shape: f32[32,128], index: 6, kind: output, shape index: {}]
  %s7 = sld [smem:[#allocation0]]
  $region65: #{tpu_custom_call.1} parent=0
    _
  %s9 = ssub.s32 1, %s7
  %s10 = scalar_select 0, %s9, %s7
  %12 = dma.hbm_to_smem %s0, 16, [#allocation3], [#allocation2]
  %13 = dma.done [#allocation2], 16
  %14 = sfence
  $region1: #{tpu_custom_call.1} parent=0
    #allocation4 [shape = 'u8[65536]{0}', space=vmem, size = 0x10000, scoped, tag = 'input window, operand 1']
    #allocation5 [shape = 's32[2]{0}', space=sflag, size = 0x8, scoped, tag = 'scoped memory for tpu_custom_call.1']
    #allocation6 [shape = 's32[2]{0}', space=sflag, size = 0x8, scoped, tag = 'scoped memory for tpu_custom_call.1']
    #allocation7 [shape = 'u8[65536]{0}', space=vmem, size = 0x10000, scoped, tag = 'input window, operand 2']
    #allocation8 [shape = 's32[2]{0}', space=sflag, size = 0x8, scoped, tag = 'scoped memory for tpu_custom_call.1']
    #allocation9 [shape = 'u8[32768]{0}', space=vmem, size = 0x8000, scoped, tag = 'input window, operand 4, single buffered']
    #allocation10 [shape = 'u8[16384]{0}', space=vmem, size = 0x4000, scoped, tag = 'output window, operand 0']
    %15 = vsyncpa [#allocation5], 0
    %s16 = scalar_lea.sflag [#allocation5], 1
    %17 = vsyncpa %s16, 0
    %18 = vsyncpa [#allocation8], 0
    %s19 = scalar_lea.sflag [#allocation8], 1
    %20 = vsyncpa %s19, 0
    %21 = vsyncpa [#allocation6], 0
    %s22 = scalar_lea.sflag [#allocation6], 1
    %23 = vsyncpa %s22, 0
    loop: start=0, step=1, limit=4
    $region2: #{tpu_custom_call.1} parent=1 // loop_pre_header
      _
    $region3: #{tpu_custom_call.1} parent=1 // loop_header
      %s25 = sphi 0, %s29
      %p26 = scmp.ge.s32.totalorder %s25, 4
      %s35 = sphi 0, %s37
      %s38 = sphi 0, %s35
      %s39 = sphi 0, %s38
      %s55 = sphi 0, %s39
      %s63 = sphi 0, %s65
      %s66 = sphi 0, %s63
      %s67 = sphi 0, %s66
      %s83 = sphi 0, %s67
      %s91 = sphi 0, %s93
      %s94 = sphi 0, %s91
      %s95 = sphi 0, %s94
      %s111 = sphi 0, %s95
      %s115 = sphi 0, %s115
      %s117 = sphi 0, %s115
      %s118 = sphi 0, %s117
      %s132 = sphi 0, %s118
      %s136 = sphi 0, %s136
      %s138 = sphi 0, %s136
      %s139 = sphi 0, %s138
      %s153 = sphi 0, %s139
      %s159 = sphi 0, %s161
      %s162 = sphi 0, %s159
      %s163 = sphi 0, %s162
      %s179 = sphi 0, %s163
    $region4: #{tpu_custom_call.1} parent=1 // loop_header_branch
      %28 = sbr.rel (%p26) target = $region8
    $region5: #{tpu_custom_call.1} parent=1 // loop_body
      %s30 = ssub.s32 %s25, 1
      %s31 = ssub.s32 %s25, 2
      %s32 = sadd.s32 %s25, 1
      %s33 = ssub.s32 %s25, %s32
      %p34 = scmp.eq.s32.totalorder %s33, 0
      %s36 = sadd.s32 %s35, 1
      %s37 = scalar_select %p34, %s35, %s36
      %p40 = pneg %p34
      %p41 = scmp.eq.s32.totalorder %s25, 1
      %p42 = por %p40, %p41
      %p43 = scmp.ne.s32.totalorder %s35, %s38
      %p44 = scmp.eq.s32.totalorder %s25, 0
      %p45 = por %p43, %p44
      %p46 = scmp.ne.s32.totalorder %s35, %s38
      %p47 = scmp.eq.s32.totalorder %s30, 1
      %p48 = por %p46, %p47
      %p49 = scmp.ne.s32.totalorder %s38, %s39
      %p50 = scmp.eq.s32.totalorder %s30, 0
      %p51 = por %p49, %p50
      %p52 = scmp.ne.s32.totalorder %s38, %s39
      %p53 = scmp.eq.s32.totalorder %s31, 1
      %p54 = por %p52, %p53
      %p56 = scmp.ne.s32.totalorder %s39, %s55
      %p57 = scmp.eq.s32.totalorder %s31, 0
      %p58 = por %p56, %p57
      %s59 = sld [smem:[#allocation3 + %s25]]
      %s60 = sld [smem:[#allocation3 + %s32]]
      %s61 = ssub.s32 %s59, %s60
      %p62 = scmp.eq.s32.totalorder %s61, 0
      %s64 = sadd.s32 %s63, 1
      %s65 = scalar_select %p62, %s63, %s64
      %p68 = pneg %p62
      %p69 = scmp.eq.s32.totalorder %s25, 1
      %p70 = por %p68, %p69
      %p71 = scmp.ne.s32.totalorder %s63, %s66
      %p72 = scmp.eq.s32.totalorder %s25, 0
      %p73 = por %p71, %p72
      %p74 = scmp.ne.s32.totalorder %s63, %s66
      %p75 = scmp.eq.s32.totalorder %s30, 1
      %p76 = por %p74, %p75
      %p77 = scmp.ne.s32.totalorder %s66, %s67
      %p78 = scmp.eq.s32.totalorder %s30, 0
      %p79 = por %p77, %p78
      %p80 = scmp.ne.s32.totalorder %s66, %s67
      %p81 = scmp.eq.s32.totalorder %s31, 1
      %p82 = por %p80, %p81
      %p84 = scmp.ne.s32.totalorder %s67, %s83
      %p85 = scmp.eq.s32.totalorder %s31, 0
      %p86 = por %p84, %p85
      %s87 = sld [smem:[#allocation3 + %s25]]
      %s88 = sld [smem:[#allocation3 + %s32]]
      %s89 = ssub.s32 %s87, %s88
      %p90 = scmp.eq.s32.totalorder %s89, 0
      %s92 = sadd.s32 %s91, 1
      %s93 = scalar_select %p90, %s91, %s92
      %p96 = pneg %p90
      %p97 = scmp.eq.s32.totalorder %s25, 1
      %p98 = por %p96, %p97
      %p99 = scmp.ne.s32.totalorder %s91, %s94
      %p100 = scmp.eq.s32.totalorder %s25, 0
      %p101 = por %p99, %p100
      %p102 = scmp.ne.s32.totalorder %s91, %s94
      %p103 = scmp.eq.s32.totalorder %s30, 1
      %p104 = por %p102, %p103
      %p105 = scmp.ne.s32.totalorder %s94, %s95
      %p106 = scmp.eq.s32.totalorder %s30, 0
      %p107 = por %p105, %p106
      %p108 = scmp.ne.s32.totalorder %s94, %s95
      %p109 = scmp.eq.s32.totalorder %s31, 1
      %p110 = por %p108, %p109
      %p112 = scmp.ne.s32.totalorder %s95, %s111
      %p113 = scmp.eq.s32.totalorder %s31, 0
      %p114 = por %p112, %p113
      %s116 = sadd.s32 %s115, 1
      %p119 = scmp.eq.s32.totalorder %s25, 1
      %p120 = scmp.ne.s32.totalorder %s115, %s117
      %p121 = scmp.eq.s32.totalorder %s25, 0
      %p122 = por %p120, %p121
      %p123 = scmp.ne.s32.totalorder %s115, %s117
      %p124 = scmp.eq.s32.totalorder %s30, 1
      %p125 = por %p123, %p124
      %p126 = scmp.ne.s32.totalorder %s117, %s118
      %p127 = scmp.eq.s32.totalorder %s30, 0
      %p128 = por %p126, %p127
      %p129 = scmp.ne.s32.totalorder %s117, %s118
      %p130 = scmp.eq.s32.totalorder %s31, 1
      %p131 = por %p129, %p130
      %p133 = scmp.ne.s32.totalorder %s118, %s132
      %p134 = scmp.eq.s32.totalorder %s31, 0
      %p135 = por %p133, %p134
      %s137 = sadd.s32 %s136, 1
      %p140 = scmp.eq.s32.totalorder %s25, 1
      %p141 = scmp.ne.s32.totalorder %s136, %s138
      %p142 = scmp.eq.s32.totalorder %s25, 0
      %p143 = por %p141, %p142
      %p144 = scmp.ne.s32.totalorder %s136, %s138
      %p145 = scmp.eq.s32.totalorder %s30, 1
      %p146 = por %p144, %p145
      %p147 = scmp.ne.s32.totalorder %s138, %s139
      %p148 = scmp.eq.s32.totalorder %s30, 0
      %p149 = por %p147, %p148
      %p150 = scmp.ne.s32.totalorder %s138, %s139
      %p151 = scmp.eq.s32.totalorder %s31, 1
      %p152 = por %p150, %p151
      %p154 = scmp.ne.s32.totalorder %s139, %s153
      %p155 = scmp.eq.s32.totalorder %s31, 0
      %p156 = por %p154, %p155
      %s157 = ssub.s32 %s25, %s32
      %p158 = scmp.eq.s32.totalorder %s157, 0
      %s160 = sadd.s32 %s159, 1
      %s161 = scalar_select %p158, %s159, %s160
      %p164 = pneg %p158
      %p165 = scmp.eq.s32.totalorder %s25, 1
      %p166 = por %p164, %p165
      %p167 = scmp.ne.s32.totalorder %s159, %s162
      %p168 = scmp.eq.s32.totalorder %s25, 0
      %p169 = por %p167, %p168
      %p170 = scmp.ne.s32.totalorder %s159, %s162
      %p171 = scmp.eq.s32.totalorder %s30, 1
      %p172 = por %p170, %p171
      %p173 = scmp.ne.s32.totalorder %s162, %s163
      %p174 = scmp.eq.s32.totalorder %s30, 0
      %p175 = por %p173, %p174
      %p176 = scmp.ne.s32.totalorder %s162, %s163
      %p177 = scmp.eq.s32.totalorder %s31, 1
      %p178 = por %p176, %p177
      %p180 = scmp.ne.s32.totalorder %s163, %s179
      %p181 = scmp.eq.s32.totalorder %s31, 0
      %p182 = por %p180, %p181
      %p183 = scmp.le.s32.totalorder 1, %s25
      %p184 = scmp.lt.s32.totalorder %s25, 3
      %p185 = pnand %p183, %p184
      %p186 = pneg %p185
      // Predicated region
      $region9: #{tpu_custom_call.1} parent=5 // pred_check
        _
      $region10: #{tpu_custom_call.1} parent=5 // pred_check_branch
        %188 = sbr.rel (%p185) target = $region12
      $region11: #{tpu_custom_call.1} parent=5 // pred_region
        %s189 = ssub.s32 %s25, 1
        // Predicated region
        $region13: #{tpu_custom_call.1} parent=11 // pred_check
          %p190 = pneg %p128
        $region14: #{tpu_custom_call.1} parent=11 // pred_check_branch
          %192 = sbr.rel (%p190) target = $region16
        $region15: #{tpu_custom_call.1} parent=11 // pred_region
          %s194 = ssub.s32 1024, 1024
          %195 = vsyncadd [#allocation8], %s194
          %s196 = sshll.u32 [#allocation9], 4
          %s197 = int_to_ptr.vmem [resolvable:$true] %s196
          %202 = dma.hbm_to_vmem [thread:$0]  %s4, 1024, %s197, [#allocation8], 64, 64, 4
        $region16: #{tpu_custom_call.1} parent=11 // pred_fallthru
          _
        // Predicated region
        $region17: #{tpu_custom_call.1} parent=11 // pred_check
          %p203 = pneg %p149
        $region18: #{tpu_custom_call.1} parent=11 // pred_check_branch
          %205 = sbr.rel (%p203) target = $region20
        $region19: #{tpu_custom_call.1} parent=11 // pred_region
          _
        $region20: #{tpu_custom_call.1} parent=11 // pred_fallthru
          _
      $region12: #{tpu_custom_call.1} parent=5 // pred_fallthru
        _
      %p206 = scmp.lt.s32.totalorder %s25, 2
      // Predicated region
      $region21: #{tpu_custom_call.1} parent=5 // pred_check
        %p207 = pneg %p206
      $region22: #{tpu_custom_call.1} parent=5 // pred_check_branch
        %209 = sbr.rel (%p207) target = $region24
      $region23: #{tpu_custom_call.1} parent=5 // pred_region
        // Predicated region
        $region25: #{tpu_custom_call.1} parent=23 // pred_check
          %p210 = pneg %p45
        $region26: #{tpu_custom_call.1} parent=23 // pred_check_branch
          %212 = sbr.rel (%p210) target = $region28
        $region27: #{tpu_custom_call.1} parent=23 // pred_region
          %s213 = sand.u32 %s35, 1
          %s214 = scalar_lea.sflag [#allocation5], %s213
          %s215 = sand.u32 %s35, 1
          %s216 = smul.addr %s215, 64
          %s217 = scalar_lea.vmem [#allocation4], %s216
          %s218 = smul.u32 16, %s25
          %s220 = ssub.s32 1024, 1024
          %221 = vsyncadd %s214, %s220
          %s222 = smul.addr %s218, 64
          %s223 = scalar_lea.hbm %s1, %s222
          %s224 = sshll.u32 %s217, 4
          %s225 = int_to_ptr.vmem [resolvable:$true] %s224
          %230 = dma.hbm_to_vmem [thread:$0]  %s223, 1024, %s225, %s214, 64, 64, 4
        $region28: #{tpu_custom_call.1} parent=23 // pred_fallthru
          _
        // Predicated region
        $region29: #{tpu_custom_call.1} parent=23 // pred_check
          %p231 = pneg %p73
        $region30: #{tpu_custom_call.1} parent=23 // pred_check_branch
          %233 = sbr.rel (%p231) target = $region32
        $region31: #{tpu_custom_call.1} parent=23 // pred_region
          %s234 = sand.u32 %s25, 1
          %s235 = scalar_lea.sflag [#allocation8], %s234
          %s236 = sand.u32 %s63, 1
          %s237 = smul.addr %s236, 64
          %s238 = scalar_lea.vmem [#allocation7], %s237
          %s239 = sld [smem:[#allocation3 + %s25]]
          %s241 = ssub.s32 1024, 1024
          %242 = vsyncadd %s235, %s241
          %s243 = smul.addr %s239, 16
          %s244 = smul.addr %s243, 64
          %s245 = scalar_lea.hbm %s2, %s244
          %s246 = sshll.u32 %s238, 4
          %s247 = int_to_ptr.vmem [resolvable:$true] %s246
          %252 = dma.hbm_to_vmem [thread:$0]  %s245, 1024, %s247, %s235, 64, 64, 4
        $region32: #{tpu_custom_call.1} parent=23 // pred_fallthru
          _
        // Predicated region
        $region33: #{tpu_custom_call.1} parent=23 // pred_check
          %p253 = pneg %p101
        $region34: #{tpu_custom_call.1} parent=23 // pred_check_branch
          %255 = sbr.rel (%p253) target = $region36
        $region35: #{tpu_custom_call.1} parent=23 // pred_region
          %s256 = sld [smem:[#allocation3 + %s25]]
          %p257 = scmp.lt.s32.totalorder %s256, 1
          %s258 = scalar_select %p257, %s256, 1
          %s259 = scalar_lea.vmem %s3, %s258
          %s260 = sld [smem:[#allocation3 + %s25]]
        $region36: #{tpu_custom_call.1} parent=23 // pred_fallthru
          _
      $region24: #{tpu_custom_call.1} parent=5 // pred_fallthru
        _
      %p261 = scmp.le.s32.totalorder 1, %s25
      %p262 = scmp.lt.s32.totalorder %s25, 3
      %p263 = pnand %p261, %p262
      %p264 = pneg %p263
      // Predicated region
      $region37: #{tpu_custom_call.1} parent=5 // pred_check
        _
      $region38: #{tpu_custom_call.1} parent=5 // pred_check_branch
        %266 = sbr.rel (%p263) target = $region40
      $region39: #{tpu_custom_call.1} parent=5 // pred_region
        %s267 = ssub.s32 %s25, 1
        %s268 = sand.u32 %s38, 1
        %s269 = scalar_lea.sflag [#allocation5], %s268
        %s270 = sand.u32 %s38, 1
        %s271 = smul.addr %s270, 64
        %s272 = scalar_lea.vmem [#allocation4], %s271
        // Predicated region
        $region41: #{tpu_custom_call.1} parent=39 // pred_check
          %p273 = pneg %p51
        $region42: #{tpu_custom_call.1} parent=39 // pred_check_branch
          %275 = sbr.rel (%p273) target = $region44
        $region43: #{tpu_custom_call.1} parent=39 // pred_region
          %276 = dma.done %s269, 1024
        $region44: #{tpu_custom_call.1} parent=39 // pred_fallthru
          _
        %s277 = sand.u32 %s30, 1
        %s278 = scalar_lea.sflag [#allocation8], %s277
        %s279 = sand.u32 %s66, 1
        %s280 = smul.addr %s279, 64
        %s281 = scalar_lea.vmem [#allocation7], %s280
        // Predicated region
        $region45: #{tpu_custom_call.1} parent=39 // pred_check
          %p282 = pneg %p79
        $region46: #{tpu_custom_call.1} parent=39 // pred_check_branch
          %284 = sbr.rel (%p282) target = $region48
        $region47: #{tpu_custom_call.1} parent=39 // pred_region
          %285 = dma.done %s278, 1024
        $region48: #{tpu_custom_call.1} parent=39 // pred_fallthru
          _
        // Predicated region
        $region49: #{tpu_custom_call.1} parent=39 // pred_check
          %p286 = pneg %p128
        $region50: #{tpu_custom_call.1} parent=39 // pred_check_branch
          %288 = sbr.rel (%p286) target = $region52
        $region51: #{tpu_custom_call.1} parent=39 // pred_region
          %289 = dma.done [#allocation8], 1024
        $region52: #{tpu_custom_call.1} parent=39 // pred_fallthru
          _
        %s290 = sand.u32 %s38, 1
        %s291 = scalar_lea.sflag [#allocation5], %s290
        %s292 = sand.u32 %s38, 1
        %s293 = smul.addr %s292, 64
        %s294 = scalar_lea.vmem [#allocation4], %s293
        %p295 = pneg %p51
        %p296 = pneg %p48
        %s297 = sand.u32 %s30, 1
        %s298 = scalar_lea.sflag [#allocation8], %s297
        %s299 = sand.u32 %s66, 1
        %s300 = smul.addr %s299, 64
        %s301 = scalar_lea.vmem [#allocation7], %s300
        %p302 = pneg %p79
        %p303 = pneg %p76
        %s304 = sld [smem:[#allocation3 + %s30]]
        %p305 = scmp.lt.s32.totalorder %s304, 1
        %s306 = scalar_select %p305, %s304, 1
        %s307 = scalar_lea.vmem %s3, %s306
        %p308 = pneg %p107
        %p309 = pneg %p104
        %p310 = pneg %p128
        %p311 = pneg %p125
        %p312 = pneg %p149
        %p313 = pneg %p146
        %p314 = pneg %p175
        %p315 = pneg %p172
        %s316 = sand.u32 %s162, 1
        %s317 = scalar_lea.sflag [#allocation6], %s316
        %s318 = sand.u32 %s162, 1
        %s319 = smul.addr %s318, 16
        %s320 = scalar_lea.vmem [#allocation10], %s319
        %s321 = smul.u32 16, %s30
        %s322 = sld [smem:[#allocation3 + %s30]]
        %s323 = sld [smem:[#allocation3 + %s30]]
        %p324 = scmp.lt.s32.totalorder %s323, 1
        %s325 = scalar_select %p324, %s323, 1
        %s326 = scalar_lea.vmem %s3, %s325
        %s327 = sld [smem:[#allocation3 + %s30]]
        %s328 = smul.u32 2, %s30
        %v330 = vld [vmem:[%s272] sm:$0xf]
        %v331 = vld [vmem:[%s272 + $0x4] sm:$0xf]
        %v332 = vld [vmem:[%s272 + $0x8] sm:$0xf]
        %v333 = vld [vmem:[%s272 + $0xc] sm:$0xf]
        %v334 = vld [vmem:[%s272 + $0x10] sm:$0xf]
        %v335 = vld [vmem:[%s272 + $0x14] sm:$0xf]
        %v336 = vld [vmem:[%s272 + $0x18] sm:$0xf]
        %v337 = vld [vmem:[%s272 + $0x1c] sm:$0xf]
        %v338 = vld [vmem:[%s272 + $0x20] sm:$0xf]
        %v339 = vld [vmem:[%s272 + $0x24] sm:$0xf]
        %v340 = vld [vmem:[%s272 + $0x28] sm:$0xf]
        %v341 = vld [vmem:[%s272 + $0x2c] sm:$0xf]
        %v342 = vld [vmem:[%s272 + $0x30] sm:$0xf]
        %v343 = vld [vmem:[%s272 + $0x34] sm:$0xf]
        %v344 = vld [vmem:[%s272 + $0x38] sm:$0xf]
        %v345 = vld [vmem:[%s272 + $0x3c] sm:$0xf]
        %v346 = vld [vmem:[%s281] sm:$0xf]
        %v347 = vld [vmem:[%s281 + $0x4] sm:$0xf]
        %v348 = vld [vmem:[%s281 + $0x8] sm:$0xf]
        %v349 = vld [vmem:[%s281 + $0xc] sm:$0xf]
        %v350 = vld [vmem:[%s281 + $0x10] sm:$0xf]
        %v351 = vld [vmem:[%s281 + $0x14] sm:$0xf]
        %v352 = vld [vmem:[%s281 + $0x18] sm:$0xf]
        %v353 = vld [vmem:[%s281 + $0x1c] sm:$0xf]
        %v354 = vld [vmem:[%s281 + $0x20] sm:$0xf]
        %v355 = vld [vmem:[%s281 + $0x24] sm:$0xf]
        %v356 = vld [vmem:[%s281 + $0x28] sm:$0xf]
        %v357 = vld [vmem:[%s281 + $0x2c] sm:$0xf]
        %v358 = vld [vmem:[%s281 + $0x30] sm:$0xf]
        %v359 = vld [vmem:[%s281 + $0x34] sm:$0xf]
        %v360 = vld [vmem:[%s281 + $0x38] sm:$0xf]
        %v361 = vld [vmem:[%s281 + $0x3c] sm:$0xf]
        %v362 = vld [vmem:[%s326] sm:$0x1]
        %v364 = vlaneseq
        %v365 = vshrl.u32 %v364, 7
        %v366 = vsub.s32 0, %v365
        %v367 = vrot.slane %v362, %v366
        %v385 = vunpack.c.l.b16 %v330
        %v386 = vunpack.c.l.b16 %v331
        %v387 = vunpack.c.l.b16 %v332
        %v388 = vunpack.c.l.b16 %v333
        %v389 = vunpack.c.l.b16 %v334
        %v390 = vunpack.c.l.b16 %v335
        %v391 = vunpack.c.l.b16 %v336
        %v392 = vunpack.c.l.b16 %v337
        %v393 = vunpack.c.l.b16 %v338
        %v394 = vunpack.c.l.b16 %v339
        %v395 = vunpack.c.l.b16 %v340
        %v396 = vunpack.c.l.b16 %v341
        %v397 = vunpack.c.l.b16 %v342
        %v398 = vunpack.c.l.b16 %v343
        %v399 = vunpack.c.l.b16 %v344
        %v400 = vunpack.c.l.b16 %v345
        %v401 = vpack.c.b16 %v386, %v385
        %v402 = vpack.c.b16 %v388, %v387
        %v403 = vpack.c.b16 %v390, %v389
        %v404 = vpack.c.b16 %v392, %v391
        %v405 = vpack.c.b16 %v394, %v393
        %v406 = vpack.c.b16 %v396, %v395
        %v407 = vpack.c.b16 %v398, %v397
        %v408 = vpack.c.b16 %v400, %v399
        %v433 = vunpack.c.l.b16 %v346
        %v434 = vunpack.c.l.b16 %v347
        %v435 = vunpack.c.l.b16 %v348
        %v436 = vunpack.c.l.b16 %v349
        %v437 = vunpack.c.l.b16 %v350
        %v438 = vunpack.c.l.b16 %v351
        %v439 = vunpack.c.l.b16 %v352
        %v440 = vunpack.c.l.b16 %v353
        %v441 = vunpack.c.l.b16 %v354
        %v442 = vunpack.c.l.b16 %v355
        %v443 = vunpack.c.l.b16 %v356
        %v444 = vunpack.c.l.b16 %v357
        %v445 = vunpack.c.l.b16 %v358
        %v446 = vunpack.c.l.b16 %v359
        %v447 = vunpack.c.l.b16 %v360
        %v448 = vunpack.c.l.b16 %v361
        %v449 = vpack.c.b16 %v434, %v433
        %v450 = vpack.c.b16 %v436, %v435
        %v451 = vpack.c.b16 %v438, %v437
        %v452 = vpack.c.b16 %v440, %v439
        %v453 = vpack.c.b16 %v442, %v441
        %v454 = vpack.c.b16 %v444, %v443
        %v455 = vpack.c.b16 %v446, %v445
        %v456 = vpack.c.b16 %v448, %v447
        %465 = vmatprep.subr.bf16.mxu0 0
        %466 = vmatpush1.bf16.msra.mxu0 %v449
        %467 = vmatprep.subr.bf16.mxu0 0
        %468 = vmatpush1.bf16.msra.mxu0 %v450
        %469 = vmatprep.subr.bf16.mxu0 0
        %470 = vmatpush1.bf16.msra.mxu0 %v451
        %471 = vmatprep.subr.bf16.mxu0 0
        %472 = vmatpush1.bf16.msra.mxu0 %v452
        %473 = vmatprep.subr.bf16.mxu0 0
        %474 = vmatpush1.bf16.msra.mxu0 %v453
        %475 = vmatprep.subr.bf16.mxu0 0
        %476 = vmatpush1.bf16.msra.mxu0 %v454
        %477 = vmatprep.subr.bf16.mxu0 0
        %478 = vmatpush1.bf16.msra.mxu0 %v455
        %479 = vmatprep.subr.bf16.mxu0 0
        %480 = vmatpush1.bf16.msra.mxu0 %v456
        %481 = vmatprep.subr.bf16.mxu0 0
        %482 = vmatpush1.bf16.msra.mxu0 0
        %483 = vmatprep.subr.bf16.mxu0 0
        %484 = vmatpush1.bf16.msra.mxu0 0
        %485 = vmatprep.subr.bf16.mxu0 0
        %486 = vmatpush1.bf16.msra.mxu0 0
        %487 = vmatprep.subr.bf16.mxu0 0
        %488 = vmatpush1.bf16.msra.mxu0 0
        %489 = vmatprep.subr.bf16.mxu0 0
        %490 = vmatpush1.bf16.msra.mxu0 0
        %491 = vmatprep.subr.bf16.mxu0 0
        %492 = vmatpush1.bf16.msra.mxu0 0
        %493 = vmatprep.subr.bf16.mxu0 0
        %494 = vmatpush1.bf16.msra.mxu0 0
        %495 = vmatprep.subr.bf16.mxu0 0
        %496 = vmatpush1.bf16.msra.mxu0 0
        %497 = vmatprep.mubr.bf16.mxu0 0
        %498 = vmatmul.mubr.bf16.gmra.mrb[0].mxu0 %v401
        %v499 = vpop.f32.mrb[0].mxu0
        %v500 = vadd.f32 %v367, %v499
        %v501 = vpop.f32.mrb[0].mxu0
        %v502 = vpop.f32.mrb[0].mxu0
        %v503 = vadd.f32 %v367, %v502
        %v504 = vpop.f32.mrb[0].mxu0
        %505 = vmatprep.mubr.bf16.mxu0 0
        %506 = vmatmul.mubr.bf16.gmra.mrb[0].mxu0 %v402
        %v507 = vpop.f32.mrb[0].mxu0
        %v508 = vadd.f32 %v367, %v507
        %v509 = vpop.f32.mrb[0].mxu0
        %v510 = vpop.f32.mrb[0].mxu0
        %v511 = vadd.f32 %v367, %v510
        %v512 = vpop.f32.mrb[0].mxu0
        %513 = vmatprep.mubr.bf16.mxu0 0
        %514 = vmatmul.mubr.bf16.gmra.mrb[0].mxu0 %v403
        %v515 = vpop.f32.mrb[0].mxu0
        %v516 = vadd.f32 %v367, %v515
        %v517 = vpop.f32.mrb[0].mxu0
        %v518 = vpop.f32.mrb[0].mxu0
        %v519 = vadd.f32 %v367, %v518
        %v520 = vpop.f32.mrb[0].mxu0
        %521 = vmatprep.mubr.bf16.mxu0 0
        %522 = vmatmul.mubr.bf16.gmra.mrb[0].mxu0 %v404
        %v523 = vpop.f32.mrb[0].mxu0
        %v524 = vadd.f32 %v367, %v523
        %v525 = vpop.f32.mrb[0].mxu0
        %v526 = vpop.f32.mrb[0].mxu0
        %v527 = vadd.f32 %v367, %v526
        %v528 = vpop.f32.mrb[0].mxu0
        %529 = vmatprep.mubr.bf16.mxu0 0
        %530 = vmatmul.mubr.bf16.gmra.mrb[0].mxu0 %v405
        %v531 = vpop.f32.mrb[0].mxu0
        %v532 = vadd.f32 %v367, %v531
        %v533 = vpop.f32.mrb[0].mxu0
        %v534 = vpop.f32.mrb[0].mxu0
        %v535 = vadd.f32 %v367, %v534
        %v536 = vpop.f32.mrb[0].mxu0
        %537 = vmatprep.mubr.bf16.mxu0 0
        %538 = vmatmul.mubr.bf16.gmra.mrb[0].mxu0 %v406
        %v539 = vpop.f32.mrb[0].mxu0
        %v540 = vadd.f32 %v367, %v539
        %v541 = vpop.f32.mrb[0].mxu0
        %v542 = vpop.f32.mrb[0].mxu0
        %v543 = vadd.f32 %v367, %v542
        %v544 = vpop.f32.mrb[0].mxu0
        %545 = vmatprep.mubr.bf16.mxu0 0
        %546 = vmatmul.mubr.bf16.gmra.mrb[0].mxu0 %v407
        %v547 = vpop.f32.mrb[0].mxu0
        %v548 = vadd.f32 %v367, %v547
        %v549 = vpop.f32.mrb[0].mxu0
        %v550 = vpop.f32.mrb[0].mxu0
        %v551 = vadd.f32 %v367, %v550
        %v552 = vpop.f32.mrb[0].mxu0
        %553 = vmatprep.mubr.bf16.mxu0 0
        %554 = vmatmul.mubr.bf16.gmra.mrb[0].mxu0 %v408
        %v555 = vpop.f32.mrb[0].mxu0
        %v556 = vadd.f32 %v367, %v555
        %v557 = vpop.f32.mrb[0].mxu0
        %v558 = vpop.f32.mrb[0].mxu0
        %v559 = vadd.f32 %v367, %v558
        %v560 = vpop.f32.mrb[0].mxu0
        %561 = vdwg.mxu0
        %v562 = vmax.f32 %v500, 0.0
        %v563 = vmax.f32 %v503, 0.0
        %v564 = vmax.f32 %v508, 0.0
        %v565 = vmax.f32 %v511, 0.0
        %v566 = vmax.f32 %v516, 0.0
        %v567 = vmax.f32 %v519, 0.0
        %v568 = vmax.f32 %v524, 0.0
        %v569 = vmax.f32 %v527, 0.0
        %v570 = vmax.f32 %v532, 0.0
        %v571 = vmax.f32 %v535, 0.0
        %v572 = vmax.f32 %v540, 0.0
        %v573 = vmax.f32 %v543, 0.0
        %v574 = vmax.f32 %v548, 0.0
        %v575 = vmax.f32 %v551, 0.0
        %v576 = vmax.f32 %v556, 0.0
        %v577 = vmax.f32 %v559, 0.0
        %v578 = vrot.slane %v562, 4
        %v579 = vmax.f32 %v562, %v578
        %v580 = vrot.slane %v579, 2
        %v581 = vmax.f32 %v579, %v580
        %v582 = vrot.slane %v581, 1
        %v583 = vmax.f32 %v581, %v582
        %v584 = vrot.slane %v563, 4
        %v585 = vmax.f32 %v563, %v584
        %v586 = vrot.slane %v585, 2
        %v587 = vmax.f32 %v585, %v586
        %v588 = vrot.slane %v587, 1
        %v589 = vmax.f32 %v587, %v588
        %v590 = vrot.slane %v564, 4
        %v591 = vmax.f32 %v564, %v590
        %v592 = vrot.slane %v591, 2
        %v593 = vmax.f32 %v591, %v592
        %v594 = vrot.slane %v593, 1
        %v595 = vmax.f32 %v593, %v594
        %v596 = vrot.slane %v565, 4
        %v597 = vmax.f32 %v565, %v596
        %v598 = vrot.slane %v597, 2
        %v599 = vmax.f32 %v597, %v598
        %v600 = vrot.slane %v599, 1
        %v601 = vmax.f32 %v599, %v600
        %v602 = vrot.slane %v566, 4
        %v603 = vmax.f32 %v566, %v602
        %v604 = vrot.slane %v603, 2
        %v605 = vmax.f32 %v603, %v604
        %v606 = vrot.slane %v605, 1
        %v607 = vmax.f32 %v605, %v606
        %v608 = vrot.slane %v567, 4
        %v609 = vmax.f32 %v567, %v608
        %v610 = vrot.slane %v609, 2
        %v611 = vmax.f32 %v609, %v610
        %v612 = vrot.slane %v611, 1
        %v613 = vmax.f32 %v611, %v612
        %v614 = vrot.slane %v568, 4
        %v615 = vmax.f32 %v568, %v614
        %v616 = vrot.slane %v615, 2
        %v617 = vmax.f32 %v615, %v616
        %v618 = vrot.slane %v617, 1
        %v619 = vmax.f32 %v617, %v618
        %v620 = vrot.slane %v569, 4
        %v621 = vmax.f32 %v569, %v620
        %v622 = vrot.slane %v621, 2
        %v623 = vmax.f32 %v621, %v622
        %v624 = vrot.slane %v623, 1
        %v625 = vmax.f32 %v623, %v624
        %v626 = vrot.slane %v570, 4
        %v627 = vmax.f32 %v570, %v626
        %v628 = vrot.slane %v627, 2
        %v629 = vmax.f32 %v627, %v628
        %v630 = vrot.slane %v629, 1
        %v631 = vmax.f32 %v629, %v630
        %v632 = vrot.slane %v571, 4
        %v633 = vmax.f32 %v571, %v632
        %v634 = vrot.slane %v633, 2
        %v635 = vmax.f32 %v633, %v634
        %v636 = vrot.slane %v635, 1
        %v637 = vmax.f32 %v635, %v636
        %v638 = vrot.slane %v572, 4
        %v639 = vmax.f32 %v572, %v638
        %v640 = vrot.slane %v639, 2
        %v641 = vmax.f32 %v639, %v640
        %v642 = vrot.slane %v641, 1
        %v643 = vmax.f32 %v641, %v642
        %v644 = vrot.slane %v573, 4
        %v645 = vmax.f32 %v573, %v644
        %v646 = vrot.slane %v645, 2
        %v647 = vmax.f32 %v645, %v646
        %v648 = vrot.slane %v647, 1
        %v649 = vmax.f32 %v647, %v648
        %v650 = vrot.slane %v574, 4
        %v651 = vmax.f32 %v574, %v650
        %v652 = vrot.slane %v651, 2
        %v653 = vmax.f32 %v651, %v652
        %v654 = vrot.slane %v653, 1
        %v655 = vmax.f32 %v653, %v654
        %v656 = vrot.slane %v575, 4
        %v657 = vmax.f32 %v575, %v656
        %v658 = vrot.slane %v657, 2
        %v659 = vmax.f32 %v657, %v658
        %v660 = vrot.slane %v659, 1
        %v661 = vmax.f32 %v659, %v660
        %v662 = vrot.slane %v576, 4
        %v663 = vmax.f32 %v576, %v662
        %v664 = vrot.slane %v663, 2
        %v665 = vmax.f32 %v663, %v664
        %v666 = vrot.slane %v665, 1
        %v667 = vmax.f32 %v665, %v666
        %v668 = vrot.slane %v577, 4
        %v669 = vmax.f32 %v577, %v668
        %v670 = vrot.slane %v669, 2
        %v671 = vmax.f32 %v669, %v670
        %v672 = vrot.slane %v671, 1
        %v673 = vmax.f32 %v671, %v672
        %v674 = vpack.c.bf16 %v583, %v583
        %v675 = vpack.c.bf16 %v589, %v589
        %v676 = vpack.c.bf16 %v595, %v595
        %v677 = vpack.c.bf16 %v601, %v601
        %v678 = vpack.c.bf16 %v607, %v607
        %v679 = vpack.c.bf16 %v613, %v613
        %v680 = vpack.c.bf16 %v619, %v619
        %v681 = vpack.c.bf16 %v625, %v625
        %v682 = vpack.c.bf16 %v631, %v631
        %v683 = vpack.c.bf16 %v637, %v637
        %v684 = vpack.c.bf16 %v643, %v643
        %v685 = vpack.c.bf16 %v649, %v649
        %v686 = vpack.c.bf16 %v655, %v655
        %v687 = vpack.c.bf16 %v661, %v661
        %v688 = vpack.c.bf16 %v667, %v667
        %v689 = vpack.c.bf16 %v673, %v673
        %v690 = vld [vmem:[#allocation9] sm:$0xf]
        %v691 = vld [vmem:[#allocation9 + $0x4] sm:$0xf]
        %v692 = vld [vmem:[#allocation9 + $0x8] sm:$0xf]
        %v693 = vld [vmem:[#allocation9 + $0xc] sm:$0xf]
        %v694 = vld [vmem:[#allocation9 + $0x10] sm:$0xf]
        %v695 = vld [vmem:[#allocation9 + $0x14] sm:$0xf]
        %v696 = vld [vmem:[#allocation9 + $0x18] sm:$0xf]
        %v697 = vld [vmem:[#allocation9 + $0x1c] sm:$0xf]
        %v698 = vld [vmem:[#allocation9 + $0x20] sm:$0xf]
        %v699 = vld [vmem:[#allocation9 + $0x24] sm:$0xf]
        %v700 = vld [vmem:[#allocation9 + $0x28] sm:$0xf]
        %v701 = vld [vmem:[#allocation9 + $0x2c] sm:$0xf]
        %v702 = vld [vmem:[#allocation9 + $0x30] sm:$0xf]
        %v703 = vld [vmem:[#allocation9 + $0x34] sm:$0xf]
        %v704 = vld [vmem:[#allocation9 + $0x38] sm:$0xf]
        %v705 = vld [vmem:[#allocation9 + $0x3c] sm:$0xf]
        %v706 = vld [vmem:[%s5] sm:$0x1]
        %v708 = vlaneseq
        %v709 = vshrl.u32 %v708, 7
        %v710 = vsub.s32 0, %v709
        %v711 = vrot.slane %v706, %v710
        %v729 = vunpack.c.l.b16 %v674
        %v730 = vunpack.c.l.b16 %v675
        %v731 = vunpack.c.l.b16 %v676
        %v732 = vunpack.c.l.b16 %v677
        %v733 = vunpack.c.l.b16 %v678
        %v734 = vunpack.c.l.b16 %v679
        %v735 = vunpack.c.l.b16 %v680
        %v736 = vunpack.c.l.b16 %v681
        %v737 = vunpack.c.l.b16 %v682
        %v738 = vunpack.c.l.b16 %v683
        %v739 = vunpack.c.l.b16 %v684
        %v740 = vunpack.c.l.b16 %v685
        %v741 = vunpack.c.l.b16 %v686
        %v742 = vunpack.c.l.b16 %v687
        %v743 = vunpack.c.l.b16 %v688
        %v744 = vunpack.c.l.b16 %v689
        %vm745 = vcmask 1041409
        %v746 = vsel %vm745, %v730, %v729
        %vm747 = vcmask 1042434
        %v748 = vsel %vm747, %v731, %v746
        %vm749 = vcmask 1043459
        %v750 = vsel %vm749, %v732, %v748
        %vm751 = vcmask 1044484
        %v752 = vsel %vm751, %v733, %v750
        %vm753 = vcmask 1045509
        %v754 = vsel %vm753, %v734, %v752
        %vm755 = vcmask 1046534
        %v756 = vsel %vm755, %v735, %v754
        %vm757 = vcmask 1047559
        %v758 = vsel %vm757, %v736, %v756
        %v759 = vsel %vm745, %v738, %v737
        %v760 = vsel %vm747, %v739, %v759
        %v761 = vsel %vm749, %v740, %v760
        %v762 = vsel %vm751, %v741, %v761
        %v763 = vsel %vm753, %v742, %v762
        %v764 = vsel %vm755, %v743, %v763
        %v765 = vsel %vm757, %v744, %v764
        %v766 = vpack.c.b16 %v765, %v758
        %v784 = vunpack.c.l.b16 %v690
        %v785 = vunpack.c.l.b16 %v691
        %v786 = vunpack.c.l.b16 %v692
        %v787 = vunpack.c.l.b16 %v693
        %v788 = vunpack.c.l.b16 %v694
        %v789 = vunpack.c.l.b16 %v695
        %v790 = vunpack.c.l.b16 %v696
        %v791 = vunpack.c.l.b16 %v697
        %v792 = vunpack.c.l.b16 %v698
        %v793 = vunpack.c.l.b16 %v699
        %v794 = vunpack.c.l.b16 %v700
        %v795 = vunpack.c.l.b16 %v701
        %v796 = vunpack.c.l.b16 %v702
        %v797 = vunpack.c.l.b16 %v703
        %v798 = vunpack.c.l.b16 %v704
        %v799 = vunpack.c.l.b16 %v705
        %v800 = vpack.c.b16 %v785, %v784
        %v801 = vpack.c.b16 %v787, %v786
        %v802 = vpack.c.b16 %v789, %v788
        %v803 = vpack.c.b16 %v791, %v790
        %v804 = vpack.c.b16 %v793, %v792
        %v805 = vpack.c.b16 %v795, %v794
        %v806 = vpack.c.b16 %v797, %v796
        %v807 = vpack.c.b16 %v799, %v798
        %816 = vmatprep.subr.bf16.mxu0 0
        %817 = vmatpush1.bf16.msra.mxu0 %v800
        %818 = vmatprep.subr.bf16.mxu0 0
        %819 = vmatpush1.bf16.msra.mxu0 %v801
        %820 = vmatprep.subr.bf16.mxu0 0
        %821 = vmatpush1.bf16.msra.mxu0 %v802
        %822 = vmatprep.subr.bf16.mxu0 0
        %823 = vmatpush1.bf16.msra.mxu0 %v803
        %824 = vmatprep.subr.bf16.mxu0 0
        %825 = vmatpush1.bf16.msra.mxu0 %v804
        %826 = vmatprep.subr.bf16.mxu0 0
        %827 = vmatpush1.bf16.msra.mxu0 %v805
        %828 = vmatprep.subr.bf16.mxu0 0
        %829 = vmatpush1.bf16.msra.mxu0 %v806
        %830 = vmatprep.subr.bf16.mxu0 0
        %831 = vmatpush1.bf16.msra.mxu0 %v807
        %832 = vmatprep.subr.bf16.mxu0 0
        %833 = vmatpush1.bf16.msra.mxu0 0
        %834 = vmatprep.subr.bf16.mxu0 0
        %835 = vmatpush1.bf16.msra.mxu0 0
        %836 = vmatprep.subr.bf16.mxu0 0
        %837 = vmatpush1.bf16.msra.mxu0 0
        %838 = vmatprep.subr.bf16.mxu0 0
        %839 = vmatpush1.bf16.msra.mxu0 0
        %840 = vmatprep.subr.bf16.mxu0 0
        %841 = vmatpush1.bf16.msra.mxu0 0
        %842 = vmatprep.subr.bf16.mxu0 0
        %843 = vmatpush1.bf16.msra.mxu0 0
        %844 = vmatprep.subr.bf16.mxu0 0
        %845 = vmatpush1.bf16.msra.mxu0 0
        %846 = vmatprep.subr.bf16.mxu0 0
        %847 = vmatpush1.bf16.msra.mxu0 0
        %848 = vmatprep.mubr.bf16.mxu0 0
        %849 = vmatmul.mubr.bf16.gmra.mrb[0].mxu0 %v766
        %v850 = vpop.f32.mrb[0].mxu0
        %v851 = vadd.f32 %v711, %v850
        %v852 = vpop.f32.mrb[0].mxu0
        %v853 = vpop.f32.mrb[0].mxu0
        %v854 = vadd.f32 %v711, %v853
        %v855 = vpop.f32.mrb[0].mxu0
        %856 = vdwg.mxu0
        %v857 = vmul.f32 %v851, %v851
        %v858 = vmul.f32 %v854, %v854
        %859 = vadd.xlane.f32.xlu0 %v857
        %v860 = vpop.xlane.xlu0 %859
        %861 = vadd.xlane.f32.xlu0 %v858
        %v862 = vpop.xlane.xlu0 %861
        %v863 = vadd.f32 %v860, 1e-12
        %v864 = vadd.f32 %v862, 1e-12
        %v865 = vrsqrt.pop %v863
        %v866 = vrsqrt.pop %v864
        %v867 = vmul.f32 %v851, %v865
        %v868 = vmul.f32 %v854, %v866
        %869 = vst [vmem:[%s320] sm:$0xff] %v867
        %870 = vst [vmem:[%s320 + $0x8] sm:$0xff] %v868
        %s871 = sand.u32 %s162, 1
        %s872 = scalar_lea.sflag [#allocation6], %s871
        %s873 = sand.u32 %s162, 1
        %s874 = smul.addr %s873, 16
        %s875 = scalar_lea.vmem [#allocation10], %s874
        // Predicated region
        $region53: #{tpu_custom_call.1} parent=39 // pred_check
          %p876 = pneg %p172
        $region54: #{tpu_custom_call.1} parent=39 // pred_check_branch
          %878 = sbr.rel (%p876) target = $region56
        $region55: #{tpu_custom_call.1} parent=39 // pred_region
          %s879 = smul.u32 2, %s30
          %s881 = ssub.s32 256, 256
          %882 = vsyncadd %s872, %s881
          %s883 = smul.addr %s879, 128
          %s884 = scalar_lea.hbm %s6, %s883
          %s885 = sshll.u32 %s875, 4
          %s886 = int_to_ptr.vmem [resolvable:$true] %s885
          %891 = dma.vmem_to_hbm [thread:$0]  %s886, 256, %s884, %s872, 128, 128, 8
        $region56: #{tpu_custom_call.1} parent=39 // pred_fallthru
          _
      $region40: #{tpu_custom_call.1} parent=5 // pred_fallthru
        _
      %p892 = scmp.le.s32.totalorder 2, %s25
      // Predicated region
      $region57: #{tpu_custom_call.1} parent=5 // pred_check
        %p893 = pneg %p892
      $region58: #{tpu_custom_call.1} parent=5 // pred_check_branch
        %895 = sbr.rel (%p893) target = $region60
      $region59: #{tpu_custom_call.1} parent=5 // pred_region
        %s896 = ssub.s32 %s25, 2
        // Predicated region
        $region61: #{tpu_custom_call.1} parent=59 // pred_check
          %p897 = pneg %p178
        $region62: #{tpu_custom_call.1} parent=59 // pred_check_branch
          %899 = sbr.rel (%p897) target = $region64
        $region63: #{tpu_custom_call.1} parent=59 // pred_region
          %s900 = sand.u32 %s163, 1
          %s901 = scalar_lea.sflag [#allocation6], %s900
          %s902 = sand.u32 %s163, 1
          %s903 = smul.addr %s902, 16
          %s904 = scalar_lea.vmem [#allocation10], %s903
          %905 = dma.done %s901, 256
        $region64: #{tpu_custom_call.1} parent=59 // pred_fallthru
          _
      $region60: #{tpu_custom_call.1} parent=5 // pred_fallthru
        _
    $region6: #{tpu_custom_call.1} parent=1 // loop_footer
      %s29 = sadd.s32 1, %s25
    $region7: #{tpu_custom_call.1} parent=1 // loop_footer_branch
      %24 = sbr.rel target = $region3
    $region8: #{tpu_custom_call.1} parent=1 // loop_exit
      _
    %906 = vsyncpa [#allocation5], 1
    %s907 = scalar_lea.sflag [#allocation5], 1
    %908 = vsyncpa %s907, 1
    %909 = vsyncpa [#allocation8], 1
    %s910 = scalar_lea.sflag [#allocation8], 1
    %911 = vsyncpa %s910, 1
    %912 = vsyncpa [#allocation6], 1
    %s913 = scalar_lea.sflag [#allocation6], 1
    %914 = vsyncpa %s913, 1

</llo_original>
